<compile_context>
chip_gen: v5e
topology: v5e:2x2
jax: 0.10.0
libtpu: 0.0.40
codegen_flags: <defaults>
</compile_context>

<pallas_src>
import jax
import jax.numpy as jnp
from jax.experimental import pallas as pl
from jax.experimental.pallas import tpu as pltpu


def _mlp_classifier_kernel(x_ref, w_ref, b_ref, o_ref):
    # x_ref: (TB, H) VMEM tile, w_ref: (1, H) VMEM (resident across the grid),
    # b_ref: (1,) SMEM scalar, o_ref: (TB, 1) VMEM.
    x = x_ref[...].astype(jnp.float32)          # (TB, H)
    w = w_ref[...].astype(jnp.float32)          # (1, H) -> broadcasts over rows
    # VPU multiply + XLU lane-reduce; f32 accumulation; scalar bias from SMEM.
    logits = jnp.sum(x * w, axis=-1, keepdims=True) + b_ref[0]   # (TB, 1) f32
    o_ref[...] = logits.astype(o_ref.dtype)


def _vmem_budget():
    """(target x-block bytes, vmem_limit_bytes) per TPU generation."""
    try:
        cap = pltpu.get_tpu_info().vmem_capacity_bytes
    except Exception:
        cap = 64 << 20  # conservative: assume v7x-like 64 MiB per TensorCore
    if cap >= (100 << 20):
        # v5e / v6e: 128 MiB physical VMEM. 16 MiB blocks, 2x buffered = 32 MiB
        # plus weight/output — comfortably inside an explicit 64 MiB limit.
        return 16 << 20, 64 << 20
    # v7x: 64 MiB per TC. Keep total pipeline footprint <= ~44 MiB.
    return 14 << 20, 44 << 20


def _pick_batch_tile(batch, hidden, itemsize, target_block_bytes, min_steps=8):
    """Largest batch tile that fits the per-generation VMEM budget.

    Rounded to the sublane-packing multiple for the dtype and capped so the
    grid keeps >= min_steps steps when the batch is large enough (keeps both
    v7x TensorCores busy and leaves each enough steps to pipeline).
    """
    row_mult = {4: 8, 2: 16, 1: 32}.get(itemsize, 8)
    tb = target_block_bytes // max(1, hidden * itemsize)
    tb = min(tb, max(row_mult, batch // min_steps))
    tb = max(row_mult, (tb // row_mult) * row_mult)
    tb = min(tb, pl.cdiv(batch, row_mult) * row_mult)
    return int(tb)


def mlp_classifier_forward(x, weight, bias, *, tb=None):
    """Pallas implementation of MLPClassifier.forward (eval mode).

    Args:
      x:      (batch, hidden_dim)  -- `multi_tensor` (f32 or bf16)
      weight: (1, hidden_dim)      -- nn.Linear weight (PyTorch layout, no transpose)
      bias:   (1,)                 -- nn.Linear bias
      tb:     optional batch tile size (multiple of the dtype's sublane pack)

    Returns:
      dict with 'logits': (batch, 1)
    """
    batch, hidden = x.shape
    target_block_bytes, vmem_limit = _vmem_budget()
    if tb is None:
        tb = _pick_batch_tile(batch, hidden, x.dtype.itemsize, target_block_bytes)
    grid = (pl.cdiv(batch, tb),)

    # Keep f32 logits when x is a sub-f32 dtype (bf16 input path).
    out_dtype = x.dtype if x.dtype == jnp.float32 else jnp.float32

    cost = pl.CostEstimate(
        flops=2 * batch * hidden,
        transcendentals=0,
        bytes_accessed=(batch * hidden * x.dtype.itemsize
                        + hidden * weight.dtype.itemsize
                        + bias.dtype.itemsize
                        + batch * jnp.dtype(out_dtype).itemsize),
    )

    logits = pl.pallas_call(
        _mlp_classifier_kernel,
        out_shape=jax.ShapeDtypeStruct((batch, 1), out_dtype),
        grid_spec=pltpu.PrefetchScalarGridSpec(
            num_scalar_prefetch=0,
            grid=grid,
            in_specs=[
                # x: tiled over batch (double-buffered by the Pallas pipeline).
                pl.BlockSpec((tb, hidden), lambda i: (i, 0)),
                # weight: same block every step -> stays resident in VMEM.
                pl.BlockSpec((1, hidden), lambda i: (0, 0)),
                # bias: tiny scalar, keep it in SMEM (no per-step VMEM DMA).
                pl.BlockSpec(memory_space=pltpu.MemorySpace.SMEM),
            ],
            out_specs=pl.BlockSpec((tb, 1), lambda i: (i, 0)),
        ),
        compiler_params=pltpu.CompilerParams(
            dimension_semantics=("parallel",),
            vmem_limit_bytes=vmem_limit,
        ),
        cost_estimate=cost,
    )(x, weight, bias)

    return {"logits": logits}


if __name__ == "__main__":
    key = jax.random.PRNGKey(0)
    k_x, k_w, k_b, k_x2, k_x3 = jax.random.split(key, 5)

    hidden_dim = 768  # module default
    bound = 1.0 / (hidden_dim ** 0.5)
    # Deterministic parameter init mimicking nn.Linear: U(-1/sqrt(H), 1/sqrt(H))
    weight = jax.random.uniform(k_w, (1, hidden_dim), dtype=jnp.float32,
                                minval=-bound, maxval=bound)
    bias = jax.random.uniform(k_b, (1,), dtype=jnp.float32,
                              minval=-bound, maxval=bound)

    # Case 1: explicit tile, batch divides exactly (3 full grid steps).
    batch = 24
    x = jax.random.normal(k_x, (batch, hidden_dim), dtype=jnp.float32)
    out = mlp_classifier_forward(x, weight, bias, tb=8)
    logits = jax.block_until_ready(out["logits"])
    ref = jnp.dot(x, weight.T, precision=jax.lax.Precision.HIGHEST) + bias
    assert logits.shape == (batch, 1)
    assert jnp.allclose(logits, ref, atol=1e-5, rtol=1e-5)

    # Case 2: ragged batch + auto tile picking (partial tail block masked by Pallas).
    batch2 = 20
    x2 = jax.random.normal(k_x2, (batch2, hidden_dim), dtype=jnp.float32)
    out2 = mlp_classifier_forward(x2, weight, bias)
    logits2 = jax.block_until_ready(out2["logits"])
    ref2 = jnp.dot(x2, weight.T, precision=jax.lax.Precision.HIGHEST) + bias
    assert logits2.shape == (batch2, 1)
    assert jnp.allclose(logits2, ref2, atol=1e-5, rtol=1e-5)

    # Case 3: bf16 x (halved HBM traffic), f32 accumulation + f32 logits.
    batch3 = 64
    x3 = jax.random.normal(k_x3, (batch3, hidden_dim), dtype=jnp.float32)
    out3 = mlp_classifier_forward(x3.astype(jnp.bfloat16), weight, bias)
    logits3 = jax.block_until_ready(out3["logits"])
    ref3 = (jnp.dot(x3.astype(jnp.bfloat16).astype(jnp.float32), weight.T,
                    precision=jax.lax.Precision.HIGHEST) + bias)
    assert logits3.shape == (batch3, 1)
    assert logits3.dtype == jnp.float32
    assert jnp.allclose(logits3, ref3, atol=1e-5, rtol=1e-5)

    print("KERNEL_OK")
</pallas_src>

<mosaic_0001>
module attributes {stable_mosaic.version = 11 : i64} {
  func.func @_mlp_classifier_kernel(%arg0: i32, %arg1: memref<8x768xf32, #tpu.memory_space<vmem>>, %arg2: memref<1x768xf32, #tpu.memory_space<vmem>>, %arg3: memref<1xf32, #tpu.memory_space<smem>>, %arg4: memref<8x1xf32, #tpu.memory_space<vmem>>) attributes {dimension_semantics = [#tpu.dimension_semantics<parallel>], iteration_bounds = array<i64: 3>, scalar_prefetch = 0 : i64, scratch_operands = 0 : i64, tpu.core_type = #tpu.core_type<tc>, window_params = [{transform_indices = @transform_0, window_bounds = array<i64: 8, 768>}, {pipeline_mode = #tpu.pipeline_mode<synchronous>, transform_indices = @transform_1, window_bounds = array<i64: 1, 768>}, {transform_indices = @transform_2, window_bounds = array<i64: 1>}, {transform_indices = @transform_3, window_bounds = array<i64: 8, 1>}]} {
    %c0 = arith.constant 0 : index
    %c0_0 = arith.constant 0 : index
    %0 = vector.load %arg1[%c0, %c0_0] : memref<8x768xf32, #tpu.memory_space<vmem>>, vector<8x768xf32>
    %c0_1 = arith.constant 0 : index
    %c0_2 = arith.constant 0 : index
    %1 = vector.load %arg2[%c0_1, %c0_2] : memref<1x768xf32, #tpu.memory_space<vmem>>, vector<1x768xf32>
    %2 = vector.broadcast %1 : vector<1x768xf32> to vector<8x768xf32>
    %3 = arith.mulf %0, %2 : vector<8x768xf32>
    %cst = arith.constant dense<0.000000e+00> : vector<8xf32>
    %4 = vector.multi_reduction <add>, %3, %cst [1] : vector<8x768xf32> to vector<8xf32>
    %5 = vector.shape_cast %4 : vector<8xf32> to vector<8x1xf32>
    %c0_3 = arith.constant 0 : index
    %6 = memref.load %arg3[%c0_3] : memref<1xf32, #tpu.memory_space<smem>>
    %7 = vector.broadcast %6 : f32 to vector<8x1xf32>
    %8 = arith.addf %5, %7 : vector<8x1xf32>
    %c0_4 = arith.constant 0 : index
    %c0_5 = arith.constant 0 : index
    %9 = vector.load %arg4[%c0_4, %c0_5] : memref<8x1xf32, #tpu.memory_space<vmem>>, vector<8x1xf32>
    tpu.vector_store %arg4[%c0_4, %c0_5], %8 {strides = array<i32>} : memref<8x1xf32, #tpu.memory_space<vmem>>, vector<8x1xf32>,
    return
  }
  func.func @transform_0(%arg0: i32) -> (i32, i32) {
    %c0_i32 = arith.constant 0 : i32
    %c0_i32_0 = arith.constant 0 : i32
    return %arg0, %c0_i32 : i32, i32
  }
  func.func @transform_1(%arg0: i32) -> (i32, i32) {
    %c0_i32 = arith.constant 0 : i32
    %c0_i32_0 = arith.constant 0 : i32
    %c0_i32_1 = arith.constant 0 : i32
    return %c0_i32, %c0_i32_0 : i32, i32
  }
  func.func @transform_2(%arg0: i32) -> i32 {
    %c0_i32 = arith.constant 0 : i32
    %c0_i32_0 = arith.constant 0 : i32
    return %c0_i32 : i32
  }
  func.func @transform_3(%arg0: i32) -> (i32, i32) {
    %c0_i32 = arith.constant 0 : i32
    %c0_i32_0 = arith.constant 0 : i32
    return %arg0, %c0_i32 : i32, i32
  }
}

</mosaic_0001>

<llo_original>
// kernel: tpu_custom_call.1
$region0: #{tpu_custom_call.1}
  #allocation0 [shape = 'u32[]', space=smem, size = 0x4, offset = 0x4, fixed_abs, tag = 'smem constant byte address 0x4 - core index']
  #allocation1 [shape = 'u32[72,128]{1,0:T(1,128)}', space=vmem, size = 0x9000, scoped, tag = 'internal scratch']
  #allocation2 [shape = 'f32[1]{0:T(128)S(6)}', space=smem, size = 0x200, scoped, tag = 'scoped memory for tpu_custom_call.1']
  %s0 = inlined_call_operand.hbm [shape: f32[24,768], index: 0, kind: input, shape index: {}]
  %s1 = inlined_call_operand.hbm [shape: f32[1,768], index: 1, kind: input, shape index: {}]
  %s2 = inlined_call_operand.<no memory space> [shape: f32[1], index: 2, kind: input, shape index: {}]
  %s3 = inlined_call_operand.vmem [shape: f32[24,1], index: 3, kind: output, shape index: {}]
  %s4 = sld [smem:[#allocation0]]
  $region53: #{tpu_custom_call.1} parent=0
    _
  %s6 = ssub.s32 1, %s4
  %s7 = scalar_select 0, %s6, %s4
  %8 = sst [smem:[#allocation2]] %s2
  $region1: #{tpu_custom_call.1} parent=0
    #allocation3 [shape = 'u8[49152]{0}', space=vmem, size = 0xc000, scoped, tag = 'input window, operand 0']
    #allocation4 [shape = 's32[2]{0}', space=sflag, size = 0x8, scoped, tag = 'scoped memory for tpu_custom_call.1']
    #allocation5 [shape = 'u8[3072]{0}', space=vmem, size = 0xc00, scoped, tag = 'input window, operand 1, single buffered']
    #allocation6 [shape = 's32[1]{0}', space=sflag, size = 0x4, scoped, tag = 'scoped memory for tpu_custom_call.1']
    %9 = vsyncpa [#allocation4], 0
    %s10 = scalar_lea.sflag [#allocation4], 1
    %11 = vsyncpa %s10, 0
    %12 = vsyncpa [#allocation6], 0
    loop: start=0, step=1, limit=5
    $region2: #{tpu_custom_call.1} parent=1 // loop_pre_header
      _
    $region3: #{tpu_custom_call.1} parent=1 // loop_header
      %s14 = sphi 0, %s18
      %p15 = scmp.ge.s32.totalorder %s14, 5
      %s24 = sphi 0, %s26
      %s27 = sphi 0, %s24
      %s28 = sphi 0, %s27
      %s44 = sphi 0, %s28
      %s48 = sphi 0, %s48
      %s50 = sphi 0, %s48
      %s51 = sphi 0, %s50
      %s65 = sphi 0, %s51
      %s69 = sphi 0, %s69
      %s71 = sphi 0, %s69
      %s72 = sphi 0, %s71
      %s86 = sphi 0, %s72
      %s92 = sphi 0, %s94
      %s95 = sphi 0, %s92
      %s96 = sphi 0, %s95
      %s112 = sphi 0, %s96
    $region4: #{tpu_custom_call.1} parent=1 // loop_header_branch
      %17 = sbr.rel (%p15) target = $region8
    $region5: #{tpu_custom_call.1} parent=1 // loop_body
      %s19 = ssub.s32 %s14, 1
      %s20 = ssub.s32 %s14, 2
      %s21 = sadd.s32 %s14, 1
      %s22 = ssub.s32 %s14, %s21
      %p23 = scmp.eq.s32.totalorder %s22, 0
      %s25 = sadd.s32 %s24, 1
      %s26 = scalar_select %p23, %s24, %s25
      %p29 = pneg %p23
      %p30 = scmp.eq.s32.totalorder %s14, 2
      %p31 = por %p29, %p30
      %p32 = scmp.ne.s32.totalorder %s24, %s27
      %p33 = scmp.eq.s32.totalorder %s14, 0
      %p34 = por %p32, %p33
      %p35 = scmp.ne.s32.totalorder %s24, %s27
      %p36 = scmp.eq.s32.totalorder %s19, 2
      %p37 = por %p35, %p36
      %p38 = scmp.ne.s32.totalorder %s27, %s28
      %p39 = scmp.eq.s32.totalorder %s19, 0
      %p40 = por %p38, %p39
      %p41 = scmp.ne.s32.totalorder %s27, %s28
      %p42 = scmp.eq.s32.totalorder %s20, 2
      %p43 = por %p41, %p42
      %p45 = scmp.ne.s32.totalorder %s28, %s44
      %p46 = scmp.eq.s32.totalorder %s20, 0
      %p47 = por %p45, %p46
      %s49 = sadd.s32 %s48, 1
      %p52 = scmp.eq.s32.totalorder %s14, 2
      %p53 = scmp.ne.s32.totalorder %s48, %s50
      %p54 = scmp.eq.s32.totalorder %s14, 0
      %p55 = por %p53, %p54
      %p56 = scmp.ne.s32.totalorder %s48, %s50
      %p57 = scmp.eq.s32.totalorder %s19, 2
      %p58 = por %p56, %p57
      %p59 = scmp.ne.s32.totalorder %s50, %s51
      %p60 = scmp.eq.s32.totalorder %s19, 0
      %p61 = por %p59, %p60
      %p62 = scmp.ne.s32.totalorder %s50, %s51
      %p63 = scmp.eq.s32.totalorder %s20, 2
      %p64 = por %p62, %p63
      %p66 = scmp.ne.s32.totalorder %s51, %s65
      %p67 = scmp.eq.s32.totalorder %s20, 0
      %p68 = por %p66, %p67
      %s70 = sadd.s32 %s69, 1
      %p73 = scmp.eq.s32.totalorder %s14, 2
      %p74 = scmp.ne.s32.totalorder %s69, %s71
      %p75 = scmp.eq.s32.totalorder %s14, 0
      %p76 = por %p74, %p75
      %p77 = scmp.ne.s32.totalorder %s69, %s71
      %p78 = scmp.eq.s32.totalorder %s19, 2
      %p79 = por %p77, %p78
      %p80 = scmp.ne.s32.totalorder %s71, %s72
      %p81 = scmp.eq.s32.totalorder %s19, 0
      %p82 = por %p80, %p81
      %p83 = scmp.ne.s32.totalorder %s71, %s72
      %p84 = scmp.eq.s32.totalorder %s20, 2
      %p85 = por %p83, %p84
      %p87 = scmp.ne.s32.totalorder %s72, %s86
      %p88 = scmp.eq.s32.totalorder %s20, 0
      %p89 = por %p87, %p88
      %s90 = ssub.s32 %s14, %s21
      %p91 = scmp.eq.s32.totalorder %s90, 0
      %s93 = sadd.s32 %s92, 1
      %s94 = scalar_select %p91, %s92, %s93
      %p97 = pneg %p91
      %p98 = scmp.eq.s32.totalorder %s14, 2
      %p99 = por %p97, %p98
      %p100 = scmp.ne.s32.totalorder %s92, %s95
      %p101 = scmp.eq.s32.totalorder %s14, 0
      %p102 = por %p100, %p101
      %p103 = scmp.ne.s32.totalorder %s92, %s95
      %p104 = scmp.eq.s32.totalorder %s19, 2
      %p105 = por %p103, %p104
      %p106 = scmp.ne.s32.totalorder %s95, %s96
      %p107 = scmp.eq.s32.totalorder %s19, 0
      %p108 = por %p106, %p107
      %p109 = scmp.ne.s32.totalorder %s95, %s96
      %p110 = scmp.eq.s32.totalorder %s20, 2
      %p111 = por %p109, %p110
      %p113 = scmp.ne.s32.totalorder %s96, %s112
      %p114 = scmp.eq.s32.totalorder %s20, 0
      %p115 = por %p113, %p114
      %p116 = scmp.le.s32.totalorder 1, %s14
      %p117 = scmp.lt.s32.totalorder %s14, 4
      %p118 = pnand %p116, %p117
      %p119 = pneg %p118
      // Predicated region
      $region9: #{tpu_custom_call.1} parent=5 // pred_check
        _
      $region10: #{tpu_custom_call.1} parent=5 // pred_check_branch
        %121 = sbr.rel (%p118) target = $region12
      $region11: #{tpu_custom_call.1} parent=5 // pred_region
        %s122 = ssub.s32 %s14, 1
        // Predicated region
        $region13: #{tpu_custom_call.1} parent=11 // pred_check
          %p123 = pneg %p61
        $region14: #{tpu_custom_call.1} parent=11 // pred_check_branch
          %125 = sbr.rel (%p123) target = $region16
        $region15: #{tpu_custom_call.1} parent=11 // pred_region
          %127 = vsyncadd [#allocation6], 0
          %s129 = sshll.u32 %s1, 4
          %s130 = int_to_ptr.hbm [resolvable:$true] %s129
          %s131 = sshll.u32 [#allocation5], 4
          %s132 = int_to_ptr.vmem [resolvable:$true] %s131
          %134 = dma.hbm_to_vmem [thread:$0]  %s130, 96, %s132, [#allocation6]
        $region16: #{tpu_custom_call.1} parent=11 // pred_fallthru
          _
        // Predicated region
        $region17: #{tpu_custom_call.1} parent=11 // pred_check
          %p135 = pneg %p82
        $region18: #{tpu_custom_call.1} parent=11 // pred_check_branch
          %137 = sbr.rel (%p135) target = $region20
        $region19: #{tpu_custom_call.1} parent=11 // pred_region
          _
        $region20: #{tpu_custom_call.1} parent=11 // pred_fallthru
          _
      $region12: #{tpu_custom_call.1} parent=5 // pred_fallthru
        _
      %p138 = scmp.lt.s32.totalorder %s14, 3
      // Predicated region
      $region21: #{tpu_custom_call.1} parent=5 // pred_check
        %p139 = pneg %p138
      $region22: #{tpu_custom_call.1} parent=5 // pred_check_branch
        %141 = sbr.rel (%p139) target = $region24
      $region23: #{tpu_custom_call.1} parent=5 // pred_region
        // Predicated region
        $region25: #{tpu_custom_call.1} parent=23 // pred_check
          %p142 = pneg %p34
        $region26: #{tpu_custom_call.1} parent=23 // pred_check_branch
          %144 = sbr.rel (%p142) target = $region28
        $region27: #{tpu_custom_call.1} parent=23 // pred_region
          %s145 = sand.u32 %s24, 1
          %s146 = scalar_lea.sflag [#allocation4], %s145
          %s147 = sand.u32 %s24, 1
          %s148 = smul.addr %s147, 48
          %s149 = scalar_lea.vmem [#allocation3], %s148
          %151 = vsyncadd %s146, 0
          %s152 = smul.addr %s14, 6
          %s153 = smul.addr %s152, 8
          %s154 = scalar_lea.hbm %s0, %s153
          %s156 = sshll.u32 %s154, 4
          %s157 = int_to_ptr.hbm [resolvable:$true] %s156
          %s158 = sshll.u32 %s149, 4
          %s159 = int_to_ptr.vmem [resolvable:$true] %s158
          %161 = dma.hbm_to_vmem [thread:$0]  %s157, 768, %s159, %s146
        $region28: #{tpu_custom_call.1} parent=23 // pred_fallthru
          _
      $region24: #{tpu_custom_call.1} parent=5 // pred_fallthru
        _
      %p162 = scmp.le.s32.totalorder 1, %s14
      %p163 = scmp.lt.s32.totalorder %s14, 4
      %p164 = pnand %p162, %p163
      %p165 = pneg %p164
      // Predicated region
      $region29: #{tpu_custom_call.1} parent=5 // pred_check
        _
      $region30: #{tpu_custom_call.1} parent=5 // pred_check_branch
        %167 = sbr.rel (%p164) target = $region32
      $region31: #{tpu_custom_call.1} parent=5 // pred_region
        %s168 = ssub.s32 %s14, 1
        %s169 = sand.u32 %s27, 1
        %s170 = scalar_lea.sflag [#allocation4], %s169
        %s171 = sand.u32 %s27, 1
        %s172 = smul.addr %s171, 48
        %s173 = scalar_lea.vmem [#allocation3], %s172
        // Predicated region
        $region33: #{tpu_custom_call.1} parent=31 // pred_check
          %p174 = pneg %p40
        $region34: #{tpu_custom_call.1} parent=31 // pred_check_branch
          %176 = sbr.rel (%p174) target = $region36
        $region35: #{tpu_custom_call.1} parent=31 // pred_region
          %178 = dma.done %s170, 768
        $region36: #{tpu_custom_call.1} parent=31 // pred_fallthru
          _
        // Predicated region
        $region37: #{tpu_custom_call.1} parent=31 // pred_check
          %p179 = pneg %p61
        $region38: #{tpu_custom_call.1} parent=31 // pred_check_branch
          %181 = sbr.rel (%p179) target = $region40
        $region39: #{tpu_custom_call.1} parent=31 // pred_region
          %183 = dma.done [#allocation6], 96
        $region40: #{tpu_custom_call.1} parent=31 // pred_fallthru
          _
        %s184 = sand.u32 %s27, 1
        %s185 = scalar_lea.sflag [#allocation4], %s184
        %s186 = sand.u32 %s27, 1
        %s187 = smul.addr %s186, 48
        %s188 = scalar_lea.vmem [#allocation3], %s187
        %p189 = pneg %p40
        %p190 = pneg %p37
        %p191 = pneg %p61
        %p192 = pneg %p58
        %p193 = pneg %p82
        %p194 = pneg %p79
        %p195 = pneg %p108
        %p196 = pneg %p105
        %p197 = scmp.lt.s32.totalorder %s19, 2
        %s198 = scalar_select %p197, %s19, 2
        %s199 = smul.addr %s198, 8
        %s200 = scalar_lea.vmem %s3, %s199
        %p201 = scmp.lt.s32.totalorder %s19, 2
        %s202 = scalar_select %p201, %s19, 2
        %s203 = smul.addr %s202, 8
        %s204 = scalar_lea.vmem %s3, %s203
        %v205 = vld [vmem:[%s173] sm:$0xff]
        %v206 = vld [vmem:[%s173 + $0x8] sm:$0xff]
        %v207 = vld [vmem:[%s173 + $0x10] sm:$0xff]
        %v208 = vld [vmem:[%s173 + $0x18] sm:$0xff]
        %v209 = vld [vmem:[%s173 + $0x20] sm:$0xff]
        %v210 = vld [vmem:[%s173 + $0x28] sm:$0xff]
        %v211 = vld [vmem:[#allocation5] sm:$0x3f]
        %v213 = vperm.slane %v211, 0
        %v214 = vperm.slane %v211, 1
        %v215 = vperm.slane %v211, 2
        %v216 = vperm.slane %v211, 3
        %v217 = vperm.slane %v211, 4
        %v218 = vperm.slane %v211, 5
        %v225 = vmul.f32 %v205, %v213
        %v226 = vmul.f32 %v206, %v214
        %v227 = vmul.f32 %v207, %v215
        %v228 = vmul.f32 %v208, %v216
        %v229 = vmul.f32 %v209, %v217
        %v230 = vmul.f32 %v210, %v218
        %v231 = vadd.f32 %v225, %v226
        %v232 = vadd.f32 %v231, %v227
        %v233 = vadd.f32 %v232, %v228
        %v234 = vadd.f32 %v233, %v229
        %v235 = vadd.f32 %v234, %v230
        %236 = vadd.xlane.f32.xlu0 %v235
        %v237 = vpop.xlane.xlu0 %236
        %s238 = sld [smem:[#allocation2]]
        %v239 = vstv %s238
        %v240 = vadd.f32 %v237, %v239
        %vm241 = vcmask 7168
        %242 = vst.msk [vmem:[%s204] sm:$0xff] %vm241, %v240
        %p243 = scmp.lt.s32.totalorder %s19, 2
        %s244 = scalar_select %p243, %s19, 2
        %s245 = smul.addr %s244, 8
        %s246 = scalar_lea.vmem %s3, %s245
        // Predicated region
        $region41: #{tpu_custom_call.1} parent=31 // pred_check
          %p247 = pneg %p105
        $region42: #{tpu_custom_call.1} parent=31 // pred_check_branch
          %249 = sbr.rel (%p247) target = $region44
        $region43: #{tpu_custom_call.1} parent=31 // pred_region
          _
        $region44: #{tpu_custom_call.1} parent=31 // pred_fallthru
          _
      $region32: #{tpu_custom_call.1} parent=5 // pred_fallthru
        _
      %p250 = scmp.le.s32.totalorder 2, %s14
      // Predicated region
      $region45: #{tpu_custom_call.1} parent=5 // pred_check
        %p251 = pneg %p250
      $region46: #{tpu_custom_call.1} parent=5 // pred_check_branch
        %253 = sbr.rel (%p251) target = $region48
      $region47: #{tpu_custom_call.1} parent=5 // pred_region
        %s254 = ssub.s32 %s14, 2
        // Predicated region
        $region49: #{tpu_custom_call.1} parent=47 // pred_check
          %p255 = pneg %p111
        $region50: #{tpu_custom_call.1} parent=47 // pred_check_branch
          %257 = sbr.rel (%p255) target = $region52
        $region51: #{tpu_custom_call.1} parent=47 // pred_region
          %p258 = scmp.lt.s32.totalorder %s20, 2
          %s259 = scalar_select %p258, %s20, 2
          %s260 = smul.addr %s259, 8
          %s261 = scalar_lea.vmem %s3, %s260
        $region52: #{tpu_custom_call.1} parent=47 // pred_fallthru
          _
      $region48: #{tpu_custom_call.1} parent=5 // pred_fallthru
        _
    $region6: #{tpu_custom_call.1} parent=1 // loop_footer
      %s18 = sadd.s32 1, %s14
    $region7: #{tpu_custom_call.1} parent=1 // loop_footer_branch
      %13 = sbr.rel target = $region3
    $region8: #{tpu_custom_call.1} parent=1 // loop_exit
      _
    %262 = vsyncpa [#allocation4], 1
    %s263 = scalar_lea.sflag [#allocation4], 1
    %264 = vsyncpa %s263, 1
    %265 = vsyncpa [#allocation6], 1

</llo_original>
